<compile_context>
chip_gen: v6e
topology: v6e:2x2x1
jax: 0.10.0
libtpu: 0.0.40
codegen_flags: <defaults>
</compile_context>

<pallas_src>
import jax
import jax.numpy as jnp
from jax.experimental import pallas as pl
from jax.experimental.pallas import tpu as pltpu


def dense_cross_entropy_kernel(logits_hbm_ref, labels_hbm_ref, out_ref):
    # TODO(synk): the reference forward returns the literal 0 and performs no
    # loss computation; inputs are intentionally left untouched in HBM so no
    # DMA / VMEM buffers are generated for them.
    del logits_hbm_ref, labels_hbm_ref
    out_ref[0, 0] = jnp.int32(0)


def dense_cross_entropy(logits, labels):
    """Faithful port of DenseCrossEntropy.forward: returns scalar 0.

    Inputs are accepted (mirroring the module signature) but never read, so
    they stay in HBM (memory_space=pl.ANY) and cost nothing.
    """
    out = pl.pallas_call(
        dense_cross_entropy_kernel,
        out_shape=jax.ShapeDtypeStruct((1, 1), jnp.int32),
        in_specs=[
            pl.BlockSpec(memory_space=pl.ANY),   # logits: stays in HBM, no DMA
            pl.BlockSpec(memory_space=pl.ANY),   # labels: stays in HBM, no DMA
        ],
        out_specs=pl.BlockSpec(memory_space=pltpu.MemorySpace.SMEM),
    )(logits, labels)
    return out[0, 0]   # scalar 0, matching `return 0` in the PyTorch forward


if __name__ == "__main__":
    key = jax.random.PRNGKey(0)
    k1, k2 = jax.random.split(key)

    # small shapes consistent with a (batch, classes) cross-entropy call
    N, C = 8, 128
    logits = jax.random.normal(k1, (N, C), dtype=jnp.float32)
    raw = jax.random.uniform(k2, (N, C), dtype=jnp.float32)
    labels = raw / raw.sum(axis=-1, keepdims=True)  # dense (soft) labels, rows sum to 1

    loss = dense_cross_entropy(logits, labels)
    loss = jax.block_until_ready(loss)
    assert int(loss) == 0, f"expected 0, got {loss}"
    print("KERNEL_OK")
</pallas_src>

<mosaic_0001>
module attributes {stable_mosaic.version = 11 : i64} {
  func.func @dense_cross_entropy_kernel(%arg0: memref<8x128xf32, #tpu.memory_space<any>>, %arg1: memref<8x128xf32, #tpu.memory_space<any>>, %arg2: memref<1x1xi32, #tpu.memory_space<smem>>) attributes {dimension_semantics = [], scalar_prefetch = 0 : i64, scratch_operands = 0 : i64, tpu.core_type = #tpu.core_type<tc>} {
    %c0_i32 = arith.constant 0 : i32
    %c0 = arith.constant 0 : index
    %c0_0 = arith.constant 0 : index
    %0 = memref.load %arg2[%c0, %c0_0] : memref<1x1xi32, #tpu.memory_space<smem>>
    memref.store %c0_i32, %arg2[%c0, %c0_0] : memref<1x1xi32, #tpu.memory_space<smem>>
    return
  }
}

</mosaic_0001>

<llo_original>
// kernel: tpu_custom_call.1
$region0: #{tpu_custom_call.1}
  #allocation0 [shape = 'u32[]', space=smem, size = 0x4, offset = 0x4, fixed_abs, tag = 'smem constant byte address 0x4 - core index']
  #allocation1 [shape = 'u32[144,128]{1,0:T(1,128)}', space=vmem, size = 0x12000, scoped, tag = 'internal scratch']
  %s0 = inlined_call_operand.hbm [shape: f32[8,128], index: 0, kind: input, shape index: {}]
  %s1 = inlined_call_operand.hbm [shape: f32[8,128], index: 1, kind: input, shape index: {}]
  %s2 = inlined_call_operand.hbm [shape: s32[1,1], index: 2, kind: output, shape index: {}]
  %s3 = sld [smem:[#allocation0]]
  $region10: #{tpu_custom_call.1} parent=0
    _
  %s5 = ssub.s32 1, %s3
  %s6 = scalar_select 0, %s5, %s3
  $region1: #{tpu_custom_call.1} parent=0
    #allocation2 [shape = 'u8[512]{0}', space=smem, size = 0x200, scoped, tag = 'output window, operand 0, single buffered']
    #allocation3 [shape = 's32[1]{0}', space=sflag, size = 0x4, scoped, tag = 'scoped memory for tpu_custom_call.1']
    %7 = vsyncpa [#allocation3], 0
    %s8 = scalar_lea.smem [#allocation2], 0
    %9 = sst [smem:[%s8]] 0
    // Predicated region
    $region2: #{tpu_custom_call.1} parent=1 // pred_check
      _
    $region3: #{tpu_custom_call.1} parent=1 // pred_check_branch
      %11 = sbr.rel (0) target = $region5
    $region4: #{tpu_custom_call.1} parent=1 // pred_region
      %s13 = ssub.s32 16, 16
      %14 = vsyncadd [#allocation3], %s13
      %17 = dma.smem_to_hbm [#allocation2], 16, %s2, [#allocation3]
    $region5: #{tpu_custom_call.1} parent=1 // pred_fallthru
      _
    // Predicated region
    $region6: #{tpu_custom_call.1} parent=1 // pred_check
      _
    $region7: #{tpu_custom_call.1} parent=1 // pred_check_branch
      %19 = sbr.rel (0) target = $region9
    $region8: #{tpu_custom_call.1} parent=1 // pred_region
      %20 = dma.done [#allocation3], 16
    $region9: #{tpu_custom_call.1} parent=1 // pred_fallthru
      _
    %21 = sfence
    %22 = vsyncpa [#allocation3], 1

</llo_original>
